<compile_context>
chip_gen: v7x
topology: tpu7x:2x2x1
jax: 0.10.0
libtpu: 0.0.40
codegen_flags: <defaults>
</compile_context>

<pallas_src>
import functools

import jax
import jax.numpy as jnp
import numpy as np
from jax import lax
from jax.experimental import pallas as pl
from jax.experimental.pallas import tpu as pltpu

EPS = 1e-8
OUT_LANES = 128                        # lane-dense per-image output row
TARGET_PLANE_BYTES = 2 * 1024 * 1024   # target size of one (TH, W) f32 plane


# --------------------------------------------------------------------------
# helpers
# --------------------------------------------------------------------------
def _choose_h_tile(H, W, max_step, mask_itemsize, h_tile=None):
    """H tile: divides H, multiple of the sublane quantum and of max_step."""
    sublane_q = {1: 32, 2: 16}.get(mask_itemsize, 8)
    quantum = max(sublane_q, max_step)
    if h_tile is not None:
        if H % h_tile != 0 or not (h_tile == H or h_tile % quantum == 0):
            raise ValueError(
                f"h_tile must divide H and be a multiple of {quantum} "
                f"(or equal H); got {h_tile} for H={H}")
        return h_tile
    if H * W * 4 <= TARGET_PLANE_BYTES or H % quantum != 0:
        return H
    cands = [t for t in range(quantum, H, quantum) if H % t == 0]
    fits = [t for t in cands if t * W * 4 <= TARGET_PLANE_BYTES]
    if fits:
        return max(fits)
    return min(cands) if cands else H


def _vmem_limit_bytes(th, W, mask_itemsize):
    """Scoped-VMEM limit derived from the actual tile footprint (not fixed)."""
    plane_f32 = th * W * 4
    tile_io = 2 * (2 * plane_f32 + th * W * mask_itemsize)  # double-buffered p/t/mask
    live = 10 * plane_f32                                    # in-kernel intermediates
    misc = 8 << 20                                           # carries/outputs/compiler scratch
    return int(min(max(tile_io + live + misc, 24 << 20), 40 << 20))


def _lane_pack(vals, lanes):
    """Pack a list of (1,1) scalars into lanes 0..len(vals)-1 of a (1,lanes) row."""
    lane = lax.broadcasted_iota(jnp.int32, (1, lanes), 1)
    row = jnp.zeros((1, lanes), jnp.float32)
    for k, v in enumerate(vals):
        row = row + jnp.where(lane == k, v, 0.0)
    return row


# --------------------------------------------------------------------------
# Stage 1: masked log statistics for compute_scale_and_shift (HBM-bound)
# --------------------------------------------------------------------------
def _stats_kernel(p_ref, t_ref, m_ref, out_ref, *, out_lanes):
    h = pl.program_id(1)
    valid = m_ref[0] > 0                                  # native mask dtype, compared in-kernel
    mf = valid.astype(jnp.float32)
    p = p_ref[0].astype(jnp.float32)                      # native (e.g. bf16) -> f32 per tile
    t = t_ref[0].astype(jnp.float32)
    p_safe = jnp.where(valid, p, 1.0)                     # keep log() NaN-free
    t_safe = jnp.where(valid, t, 1.0)
    plog = jnp.where(valid, jnp.log(p_safe + EPS), 0.0)
    tlog = jnp.where(valid, jnp.log(t_safe + EPS), 0.0)
    vals = [
        jnp.sum(mf, keepdims=True),            # n (also reused as M by stage 2's reduction)
        jnp.sum(plog, keepdims=True),          # sum log p
        jnp.sum(tlog, keepdims=True),          # sum log t
        jnp.sum(plog * tlog, keepdims=True),   # sum log p * log t
        jnp.sum(plog * plog, keepdims=True),   # sum (log p)^2
    ]
    upd = _lane_pack(vals, out_lanes)

    @pl.when(h == 0)
    def _():
        out_ref[0] = upd

    @pl.when(h > 0)
    def _():
        out_ref[0] = out_ref[0] + upd


def _compute_stats(prediction, target, mask, th, vmem_limit):
    B, H, W = prediction.shape
    nh = H // th
    spec = pl.BlockSpec((1, th, W), lambda b, h: (b, h, 0))
    out = pl.pallas_call(
        functools.partial(_stats_kernel, out_lanes=OUT_LANES),
        out_shape=jax.ShapeDtypeStruct((B, 1, OUT_LANES), jnp.float32),
        grid=(B, nh),
        in_specs=[spec, spec, spec],
        out_specs=pl.BlockSpec((1, 1, OUT_LANES), lambda b, h: (b, 0, 0)),
        compiler_params=pltpu.CompilerParams(
            dimension_semantics=("parallel", "arbitrary"),
            vmem_limit_bytes=vmem_limit),
    )(prediction, target, mask)
    return jnp.sum(out, axis=0)[0]                        # (OUT_LANES,)


# --------------------------------------------------------------------------
# Stage 2: per-image MSE + multi-scale gradient loss partial sums (VALU-bound)
# --------------------------------------------------------------------------
def _loss_kernel(ss_ref, p_ref, t_ref, m_ref, out_ref, dcar_ref, mcar_ref,
                 *, scales, nh, th, w, max_step, out_lanes, use_mxu):
    h = pl.program_id(1)
    scale = ss_ref[0]
    shift = ss_ref[1]

    valid = m_ref[0] > 0
    mf = valid.astype(jnp.float32)
    p = p_ref[0].astype(jnp.float32)
    t = t_ref[0].astype(jnp.float32)
    res = scale * p + shift - t                           # pred_ssi - target
    d = mf * res                                          # reused by MSE + all scales

    def plane_sum(x):
        # Full-plane reduction: sublane direction on the (idle) MXU when the
        # contraction dim is sublane-aligned, tiny lane reduce afterwards.
        r = x.shape[0]
        if use_mxu and r % 8 == 0:
            ones = jnp.ones((8, r), jnp.float32)
            rowsum = lax.dot(ones, x, precision=lax.Precision.HIGHEST,
                             preferred_element_type=jnp.float32)   # (8, w'), rows equal
            return jnp.sum(rowsum[0:1, :], keepdims=True)          # (1, 1)
        return jnp.sum(x, keepdims=True)

    # Separable subsample selectors: tiny (th,1)/(1,w) iotas, broadcast at use.
    row_i = lax.broadcasted_iota(jnp.int32, (th, 1), 0)
    col_i = lax.broadcasted_iota(jnp.int32, (1, w), 1)

    vals = [plane_sum(d * res)]                           # lane 0: sum m * res^2
    g_vals, m_vals = [], []
    for s in range(scales):
        step = 1 << s
        if step == 1:
            ms = mf
        else:
            # 2 full-plane ops / scale (vs 6 with full-plane iota masks).
            sel = ((row_i & (step - 1)) == 0) & ((col_i & (step - 1)) == 0)
            ms = jnp.where(sel, mf, 0.0)
        g = jnp.zeros((1, 1), jnp.float32)
        if w > step:   # x-gradient between neighbouring subsampled columns
            wx = ms[:, step:] * ms[:, :-step]
            g = g + plane_sum(wx * jnp.abs(d[:, step:] - d[:, :-step]))
        if th > step:  # y-gradient between neighbouring subsampled rows (in-tile)
            wy = ms[step:, :] * ms[:-step, :]
            g = g + jnp.sum(wy * jnp.abs(d[step:, :] - d[:-step, :]),
                            keepdims=True)
        g_vals.append(g)                                  # lane 1+s
        if s >= 1:
            m_vals.append(plane_sum(ms))                  # lane scales+s
    upd = _lane_pack(vals + g_vals + m_vals, out_lanes)

    @pl.when(h == 0)
    def _():
        out_ref[0] = upd

    if nh > 1:
        # Cross-H-tile y-gradient pairs: last subsampled row of the previous
        # tile vs. row 0 of this tile, for every scale (tile start is a
        # multiple of max_step, so row 0 is the only subsampled boundary row).
        @pl.when(h > 0)
        def _():
            lane = lax.broadcasted_iota(jnp.int32, (1, out_lanes), 1)
            bupd = jnp.zeros((1, out_lanes), jnp.float32)
            for s in range(scales):
                step = 1 << s
                idx = max_step - step
                d_prev = dcar_ref[idx:idx + 1, :]
                m_prev = mcar_ref[idx:idx + 1, :]
                wgt = m_prev * mf[0:1, :]
                if step > 1:
                    wgt = jnp.where((col_i & (step - 1)) == 0, wgt, 0.0)
                gb = jnp.sum(wgt * jnp.abs(d[0:1, :] - d_prev), keepdims=True)
                bupd = bupd + jnp.where(lane == (1 + s), gb, 0.0)
            out_ref[0] = out_ref[0] + upd + bupd

        # Save last max_step rows for the next H tile of this image.
        dcar_ref[...] = d[th - max_step:, :]
        mcar_ref[...] = mf[th - max_step:, :]


def _loss_sums(scale_shift, prediction, target, mask, th, scales, vmem_limit):
    B, H, W = prediction.shape
    nh = H // th
    max_step = 1 << (scales - 1)
    spec = pl.BlockSpec((1, th, W), lambda b, h: (b, h, 0))
    out = pl.pallas_call(
        functools.partial(_loss_kernel, scales=scales, nh=nh, th=th, w=W,
                          max_step=max_step, out_lanes=OUT_LANES,
                          use_mxu=(th % 8 == 0)),
        out_shape=jax.ShapeDtypeStruct((B, 1, OUT_LANES), jnp.float32),
        grid=(B, nh),
        in_specs=[pl.BlockSpec(memory_space=pltpu.MemorySpace.SMEM),
                  spec, spec, spec],
        out_specs=pl.BlockSpec((1, 1, OUT_LANES), lambda b, h: (b, 0, 0)),
        scratch_shapes=[pltpu.VMEM((max_step, W), jnp.float32),
                        pltpu.VMEM((max_step, W), jnp.float32)],
        compiler_params=pltpu.CompilerParams(
            dimension_semantics=("parallel", "arbitrary"),
            vmem_limit_bytes=vmem_limit),
    )(scale_shift, prediction, target, mask)
    return jnp.sum(out, axis=0)[0]                        # (OUT_LANES,)


# --------------------------------------------------------------------------
# Full forward (ScaleAndShiftInvariantLoss.forward)
# --------------------------------------------------------------------------
def scale_and_shift_invariant_loss(prediction, target, mask, alpha=0.5,
                                   scales=4, h_tile=None):
    # Inputs stream in their native dtypes (no host upcast / mask conversion);
    # the >0 compare and f32 upcasts happen per tile inside the kernels.
    B, H, W = prediction.shape
    max_step = 1 << (scales - 1)
    mask_isz = jnp.dtype(mask.dtype).itemsize
    th = _choose_h_tile(H, W, max_step, mask_isz, h_tile)
    vmem_limit = _vmem_limit_bytes(th, W, mask_isz)

    # ---- compute_scale_and_shift (batch-pooled boolean indexing in torch is
    #      replaced by mathematically equivalent masked sufficient stats) ----
    stats = _compute_stats(prediction, target, mask, th, vmem_limit)
    n, sum_p, sum_t, sum_pt, sum_pp = (stats[0], stats[1], stats[2],
                                       stats[3], stats[4])
    p_mean = sum_p / n
    t_mean = sum_t / n
    num = sum_pt - n * p_mean * t_mean
    den = sum_pp - n * p_mean * p_mean
    scale_log = num / den + EPS
    shift = t_mean - scale_log * p_mean
    scale = jnp.exp(scale_log)
    scale_shift = jnp.stack([scale, shift]).astype(jnp.float32)

    # ---- per-image MSE + multi-scale gradient partial sums (one pass) ------
    v = _loss_sums(scale_shift, prediction, target, mask, th, scales, vmem_limit)
    mse_sum = v[0]
    M = n                                 # total valid-pixel count, reused from stage 1
    # batch-based reduction: images with M == 0 contribute 0 loss and 0 M, so
    # filtering valid images equals summing everything + a zero guard.
    total = jnp.where(M > 0, mse_sum / (2.0 * M), 0.0)
    if alpha > 0:
        reg = 0.0
        for s in range(scales):
            g = v[1 + s]
            Ms = M if s == 0 else v[1 + scales + (s - 1)]
            reg = reg + jnp.where(Ms > 0, g / Ms, 0.0)
        total = total + alpha * reg
    return total


# --------------------------------------------------------------------------
# Pure-JAX reference mirroring the PyTorch module (for validation)
# --------------------------------------------------------------------------
def reference_loss(prediction, target, mask, alpha=0.5, scales=4):
    prediction = prediction.astype(jnp.float32)
    target = target.astype(jnp.float32)
    m = mask > 0
    mf = m.astype(jnp.float32)

    # compute_scale_and_shift (log-space fit over all masked pixels in batch)
    n = jnp.sum(mf)
    plog = jnp.where(m, jnp.log(jnp.where(m, prediction, 1.0) + EPS), 0.0)
    tlog = jnp.where(m, jnp.log(jnp.where(m, target, 1.0) + EPS), 0.0)
    p_mean = jnp.sum(plog) / n
    t_mean = jnp.sum(tlog) / n
    pc = jnp.where(m, plog - p_mean, 0.0)
    tc = jnp.where(m, tlog - t_mean, 0.0)
    scale_log = jnp.sum(tc * pc) / jnp.sum(pc * pc) + EPS
    shift = t_mean - scale_log * p_mean
    pssi = jnp.exp(scale_log) * prediction + shift

    def batch_red(loss, M):
        return jnp.where(jnp.sum(M) > 0, jnp.sum(loss) / jnp.sum(M), 0.0)

    M = jnp.sum(mf, axis=(1, 2))
    res = pssi - target
    total = batch_red(jnp.sum(mf * res * res, axis=(1, 2)), 2.0 * M)
    if alpha > 0:
        reg = 0.0
        for s in range(scales):
            step = 2 ** s
            p_ = pssi[:, ::step, ::step]
            t_ = target[:, ::step, ::step]
            m_ = mf[:, ::step, ::step]
            Ms = jnp.sum(m_, axis=(1, 2))
            d = m_ * (p_ - t_)
            gx = (m_[:, :, 1:] * m_[:, :, :-1]) * jnp.abs(d[:, :, 1:] - d[:, :, :-1])
            gy = (m_[:, 1:, :] * m_[:, :-1, :]) * jnp.abs(d[:, 1:, :] - d[:, :-1, :])
            il = jnp.sum(gx, axis=(1, 2)) + jnp.sum(gy, axis=(1, 2))
            reg = reg + batch_red(il, Ms)
        total = total + alpha * reg
    return total


if __name__ == "__main__":
    key = jax.random.PRNGKey(0)
    k1, k2, k3, k4, k5, k6 = jax.random.split(key, 6)

    # Primary small test (single H tile per image, exercises the MXU-sum path).
    B, H, W = 2, 16, 16
    pred = jax.random.uniform(k1, (B, H, W), jnp.float32, 0.1, 2.0)
    tgt = jax.random.uniform(k2, (B, H, W), jnp.float32, 0.1, 2.0)
    msk = (jax.random.uniform(k3, (B, H, W)) > 0.3).astype(jnp.float32)

    out = jax.block_until_ready(
        scale_and_shift_invariant_loss(pred, tgt, msk, alpha=0.5, scales=4))
    ref = reference_loss(pred, tgt, msk, alpha=0.5, scales=4)
    np.testing.assert_allclose(np.asarray(out), np.asarray(ref),
                               rtol=2e-3, atol=1e-5)

    # Second test exercises H tiling (grid=(B, 2)) and the cross-tile
    # y-gradient carry path.
    B2, H2, W2 = 2, 64, 256
    pred2 = jax.random.uniform(k4, (B2, H2, W2), jnp.float32, 0.1, 2.0)
    tgt2 = jax.random.uniform(k5, (B2, H2, W2), jnp.float32, 0.1, 2.0)
    msk2 = (jax.random.uniform(k6, (B2, H2, W2)) > 0.3).astype(jnp.float32)

    out2 = jax.block_until_ready(
        scale_and_shift_invariant_loss(pred2, tgt2, msk2, alpha=0.5, scales=4,
                                       h_tile=32))
    ref2 = reference_loss(pred2, tgt2, msk2, alpha=0.5, scales=4)
    np.testing.assert_allclose(np.asarray(out2), np.asarray(ref2),
                               rtol=2e-3, atol=1e-5)

    print("KERNEL_OK")
</pallas_src>

<mosaic_0001>
module attributes {stable_mosaic.version = 11 : i64} {
  func.func @_stats_kernel(%arg0: i32, %arg1: i32, %arg2: memref<1x16x16xf32, #tpu.memory_space<vmem>>, %arg3: memref<1x16x16xf32, #tpu.memory_space<vmem>>, %arg4: memref<1x16x16xf32, #tpu.memory_space<vmem>>, %arg5: memref<1x1x128xf32, #tpu.memory_space<vmem>>) attributes {dimension_semantics = [#tpu.dimension_semantics<parallel>, #tpu.dimension_semantics<arbitrary>], iteration_bounds = array<i64: 2, 1>, scalar_prefetch = 0 : i64, scratch_operands = 0 : i64, tpu.core_type = #tpu.core_type<tc>, window_params = [{transform_indices = @transform_0, window_bounds = array<i64: 1, 16, 16>}, {transform_indices = @transform_1, window_bounds = array<i64: 1, 16, 16>}, {transform_indices = @transform_2, window_bounds = array<i64: 1, 16, 16>}, {transform_indices = @transform_3, window_bounds = array<i64: 1, 1, 128>}]} {
    %c0 = arith.constant 0 : index
    %c0_0 = arith.constant 0 : index
    %c0_1 = arith.constant 0 : index
    %0 = vector.load %arg4[%c0, %c0_0, %c0_1] : memref<1x16x16xf32, #tpu.memory_space<vmem>>, vector<1x16x16xf32>
    %1 = vector.shape_cast %0 : vector<1x16x16xf32> to vector<16x16xf32>
    %cst = arith.constant 0.000000e+00 : f32
    %2 = vector.broadcast %cst : f32 to vector<16x16xf32>
    %3 = arith.cmpf ogt, %1, %2 : vector<16x16xf32>
    %4 = arith.extui %3 : vector<16x16xi1> to vector<16x16xi32>
    %5 = arith.sitofp %4 : vector<16x16xi32> to vector<16x16xf32>
    %c0_2 = arith.constant 0 : index
    %c0_3 = arith.constant 0 : index
    %c0_4 = arith.constant 0 : index
    %6 = vector.load %arg2[%c0_2, %c0_3, %c0_4] : memref<1x16x16xf32, #tpu.memory_space<vmem>>, vector<1x16x16xf32>
    %7 = vector.shape_cast %6 : vector<1x16x16xf32> to vector<16x16xf32>
    %c0_5 = arith.constant 0 : index
    %c0_6 = arith.constant 0 : index
    %c0_7 = arith.constant 0 : index
    %8 = vector.load %arg3[%c0_5, %c0_6, %c0_7] : memref<1x16x16xf32, #tpu.memory_space<vmem>>, vector<1x16x16xf32>
    %9 = vector.shape_cast %8 : vector<1x16x16xf32> to vector<16x16xf32>
    %cst_8 = arith.constant 1.000000e+00 : f32
    %10 = vector.broadcast %cst_8 : f32 to vector<16x16xf32>
    %11 = arith.select %3, %7, %10 : vector<16x16xi1>, vector<16x16xf32>
    %cst_9 = arith.constant 1.000000e+00 : f32
    %12 = vector.broadcast %cst_9 : f32 to vector<16x16xf32>
    %13 = arith.select %3, %9, %12 : vector<16x16xi1>, vector<16x16xf32>
    %cst_10 = arith.constant 9.99999993E-9 : f32
    %14 = vector.broadcast %cst_10 : f32 to vector<16x16xf32>
    %15 = arith.addf %11, %14 : vector<16x16xf32>
    %16 = math.log %15 : vector<16x16xf32>
    %cst_11 = arith.constant 0.000000e+00 : f32
    %17 = vector.broadcast %cst_11 : f32 to vector<16x16xf32>
    %18 = arith.select %3, %16, %17 : vector<16x16xi1>, vector<16x16xf32>
    %cst_12 = arith.constant 9.99999993E-9 : f32
    %19 = vector.broadcast %cst_12 : f32 to vector<16x16xf32>
    %20 = arith.addf %13, %19 : vector<16x16xf32>
    %21 = math.log %20 : vector<16x16xf32>
    %cst_13 = arith.constant 0.000000e+00 : f32
    %22 = vector.broadcast %cst_13 : f32 to vector<16x16xf32>
    %23 = arith.select %3, %21, %22 : vector<16x16xi1>, vector<16x16xf32>
    %24 = vector.shape_cast %5 : vector<16x16xf32> to vector<1x16x16xf32>
    %cst_14 = arith.constant dense<0.000000e+00> : vector<1xf32>
    %25 = vector.multi_reduction <add>, %24, %cst_14 [1, 2] : vector<1x16x16xf32> to vector<1xf32>
    %26 = vector.shape_cast %25 : vector<1xf32> to vector<1x1x1xf32>
    %27 = vector.extract %26[0, 0, 0] : f32 from vector<1x1x1xf32>
    %28 = vector.broadcast %27 : f32 to vector<1x1xf32>
    %29 = vector.shape_cast %18 : vector<16x16xf32> to vector<1x16x16xf32>
    %cst_15 = arith.constant dense<0.000000e+00> : vector<1xf32>
    %30 = vector.multi_reduction <add>, %29, %cst_15 [1, 2] : vector<1x16x16xf32> to vector<1xf32>
    %31 = vector.shape_cast %30 : vector<1xf32> to vector<1x1x1xf32>
    %32 = vector.extract %31[0, 0, 0] : f32 from vector<1x1x1xf32>
    %33 = vector.broadcast %32 : f32 to vector<1x1xf32>
    %34 = vector.shape_cast %23 : vector<16x16xf32> to vector<1x16x16xf32>
    %cst_16 = arith.constant dense<0.000000e+00> : vector<1xf32>
    %35 = vector.multi_reduction <add>, %34, %cst_16 [1, 2] : vector<1x16x16xf32> to vector<1xf32>
    %36 = vector.shape_cast %35 : vector<1xf32> to vector<1x1x1xf32>
    %37 = vector.extract %36[0, 0, 0] : f32 from vector<1x1x1xf32>
    %38 = vector.broadcast %37 : f32 to vector<1x1xf32>
    %39 = arith.mulf %18, %23 : vector<16x16xf32>
    %40 = vector.shape_cast %39 : vector<16x16xf32> to vector<1x16x16xf32>
    %cst_17 = arith.constant dense<0.000000e+00> : vector<1xf32>
    %41 = vector.multi_reduction <add>, %40, %cst_17 [1, 2] : vector<1x16x16xf32> to vector<1xf32>
    %42 = vector.shape_cast %41 : vector<1xf32> to vector<1x1x1xf32>
    %43 = vector.extract %42[0, 0, 0] : f32 from vector<1x1x1xf32>
    %44 = vector.broadcast %43 : f32 to vector<1x1xf32>
    %45 = arith.mulf %18, %18 : vector<16x16xf32>
    %46 = vector.shape_cast %45 : vector<16x16xf32> to vector<1x16x16xf32>
    %cst_18 = arith.constant dense<0.000000e+00> : vector<1xf32>
    %47 = vector.multi_reduction <add>, %46, %cst_18 [1, 2] : vector<1x16x16xf32> to vector<1xf32>
    %48 = vector.shape_cast %47 : vector<1xf32> to vector<1x1x1xf32>
    %49 = vector.extract %48[0, 0, 0] : f32 from vector<1x1x1xf32>
    %50 = vector.broadcast %49 : f32 to vector<1x1xf32>
    %51 = tpu.iota {dimensions = array<i32: 1>} : vector<1x128xi32>
    %cst_19 = arith.constant 0.000000e+00 : f32
    %52 = vector.broadcast %cst_19 : f32 to vector<1x128xf32>
    %c0_i32 = arith.constant 0 : i32
    %53 = vector.broadcast %c0_i32 : i32 to vector<1x128xi32>
    %54 = arith.cmpi eq, %51, %53 : vector<1x128xi32>
    %cst_20 = arith.constant 0.000000e+00 : f32
    %55 = vector.shape_cast %28 : vector<1x1xf32> to vector<1x1xf32>
    %56 = vector.broadcast %55 : vector<1x1xf32> to vector<1x128xf32>
    %57 = vector.broadcast %cst_20 : f32 to vector<1x128xf32>
    %58 = arith.select %54, %56, %57 : vector<1x128xi1>, vector<1x128xf32>
    %59 = arith.addf %52, %58 : vector<1x128xf32>
    %c1_i32 = arith.constant 1 : i32
    %60 = vector.broadcast %c1_i32 : i32 to vector<1x128xi32>
    %61 = arith.cmpi eq, %51, %60 : vector<1x128xi32>
    %cst_21 = arith.constant 0.000000e+00 : f32
    %62 = vector.shape_cast %33 : vector<1x1xf32> to vector<1x1xf32>
    %63 = vector.broadcast %62 : vector<1x1xf32> to vector<1x128xf32>
    %64 = vector.broadcast %cst_21 : f32 to vector<1x128xf32>
    %65 = arith.select %61, %63, %64 : vector<1x128xi1>, vector<1x128xf32>
    %66 = arith.addf %59, %65 : vector<1x128xf32>
    %c2_i32 = arith.constant 2 : i32
    %67 = vector.broadcast %c2_i32 : i32 to vector<1x128xi32>
    %68 = arith.cmpi eq, %51, %67 : vector<1x128xi32>
    %cst_22 = arith.constant 0.000000e+00 : f32
    %69 = vector.shape_cast %38 : vector<1x1xf32> to vector<1x1xf32>
    %70 = vector.broadcast %69 : vector<1x1xf32> to vector<1x128xf32>
    %71 = vector.broadcast %cst_22 : f32 to vector<1x128xf32>
    %72 = arith.select %68, %70, %71 : vector<1x128xi1>, vector<1x128xf32>
    %73 = arith.addf %66, %72 : vector<1x128xf32>
    %c3_i32 = arith.constant 3 : i32
    %74 = vector.broadcast %c3_i32 : i32 to vector<1x128xi32>
    %75 = arith.cmpi eq, %51, %74 : vector<1x128xi32>
    %cst_23 = arith.constant 0.000000e+00 : f32
    %76 = vector.shape_cast %44 : vector<1x1xf32> to vector<1x1xf32>
    %77 = vector.broadcast %76 : vector<1x1xf32> to vector<1x128xf32>
    %78 = vector.broadcast %cst_23 : f32 to vector<1x128xf32>
    %79 = arith.select %75, %77, %78 : vector<1x128xi1>, vector<1x128xf32>
    %80 = arith.addf %73, %79 : vector<1x128xf32>
    %c4_i32 = arith.constant 4 : i32
    %81 = vector.broadcast %c4_i32 : i32 to vector<1x128xi32>
    %82 = arith.cmpi eq, %51, %81 : vector<1x128xi32>
    %cst_24 = arith.constant 0.000000e+00 : f32
    %83 = vector.shape_cast %50 : vector<1x1xf32> to vector<1x1xf32>
    %84 = vector.broadcast %83 : vector<1x1xf32> to vector<1x128xf32>
    %85 = vector.broadcast %cst_24 : f32 to vector<1x128xf32>
    %86 = arith.select %82, %84, %85 : vector<1x128xi1>, vector<1x128xf32>
    %87 = arith.addf %80, %86 : vector<1x128xf32>
    %c0_i32_25 = arith.constant 0 : i32
    %88 = arith.cmpi eq, %arg1, %c0_i32_25 : i32
    %89 = arith.extui %88 : i1 to i32
    %c0_i32_26 = arith.constant 0 : i32
    %90 = arith.cmpi ne, %89, %c0_i32_26 : i32
    scf.if %90 {
      %c0_29 = arith.constant 0 : index
      %c0_30 = arith.constant 0 : index
      %c0_31 = arith.constant 0 : index
      %94 = vector.load %arg5[%c0_29, %c0_30, %c0_31] : memref<1x1x128xf32, #tpu.memory_space<vmem>>, vector<1x1x128xf32>
      %95 = vector.shape_cast %94 : vector<1x1x128xf32> to vector<1x128xf32>
      %96 = vector.shape_cast %87 : vector<1x128xf32> to vector<1x1x128xf32>
      tpu.vector_store %arg5[%c0_29, %c0_30, %c0_31], %96 {strides = array<i32>} : memref<1x1x128xf32, #tpu.memory_space<vmem>>, vector<1x1x128xf32>,
    } else {
    }
    %c0_i32_27 = arith.constant 0 : i32
    %91 = arith.cmpi sgt, %arg1, %c0_i32_27 : i32
    %92 = arith.extui %91 : i1 to i32
    %c0_i32_28 = arith.constant 0 : i32
    %93 = arith.cmpi ne, %92, %c0_i32_28 : i32
    scf.if %93 {
      %c0_29 = arith.constant 0 : index
      %c0_30 = arith.constant 0 : index
      %c0_31 = arith.constant 0 : index
      %94 = vector.load %arg5[%c0_29, %c0_30, %c0_31] : memref<1x1x128xf32, #tpu.memory_space<vmem>>, vector<1x1x128xf32>
      %95 = vector.shape_cast %94 : vector<1x1x128xf32> to vector<1x128xf32>
      %96 = arith.addf %95, %87 : vector<1x128xf32>
      %c0_32 = arith.constant 0 : index
      %c0_33 = arith.constant 0 : index
      %c0_34 = arith.constant 0 : index
      %97 = vector.load %arg5[%c0_32, %c0_33, %c0_34] : memref<1x1x128xf32, #tpu.memory_space<vmem>>, vector<1x1x128xf32>
      %98 = vector.shape_cast %97 : vector<1x1x128xf32> to vector<1x128xf32>
      %99 = vector.shape_cast %96 : vector<1x128xf32> to vector<1x1x128xf32>
      tpu.vector_store %arg5[%c0_32, %c0_33, %c0_34], %99 {strides = array<i32>} : memref<1x1x128xf32, #tpu.memory_space<vmem>>, vector<1x1x128xf32>,
    } else {
    }
    return
  }
  func.func @transform_0(%arg0: i32, %arg1: i32) -> (i32, i32, i32) {
    %c0_i32 = arith.constant 0 : i32
    %c0_i32_0 = arith.constant 0 : i32
    return %arg0, %arg1, %c0_i32 : i32, i32, i32
  }
  func.func @transform_1(%arg0: i32, %arg1: i32) -> (i32, i32, i32) {
    %c0_i32 = arith.constant 0 : i32
    %c0_i32_0 = arith.constant 0 : i32
    return %arg0, %arg1, %c0_i32 : i32, i32, i32
  }
  func.func @transform_2(%arg0: i32, %arg1: i32) -> (i32, i32, i32) {
    %c0_i32 = arith.constant 0 : i32
    %c0_i32_0 = arith.constant 0 : i32
    return %arg0, %arg1, %c0_i32 : i32, i32, i32
  }
  func.func @transform_3(%arg0: i32, %arg1: i32) -> (i32, i32, i32) {
    %c0_i32 = arith.constant 0 : i32
    %c0_i32_0 = arith.constant 0 : i32
    %c0_i32_1 = arith.constant 0 : i32
    return %arg0, %c0_i32, %c0_i32_0 : i32, i32, i32
  }
}

</mosaic_0001>

<llo_original>
// kernel: tpu_custom_call.1
$region0: #{tpu_custom_call.1}
  #allocation0 [shape = 'u32[]', space=smem, size = 0x4, offset = 0x4, fixed_abs, tag = 'smem constant byte address 0x4 - core index']
  #allocation1 [shape = 'u32[144,128]{1,0:T(1,128)}', space=vmem, size = 0x12000, scoped, tag = 'internal scratch']
  %s0 = inlined_call_operand.hbm [shape: f32[2,16,16], index: 0, kind: input, shape index: {}]
  %s1 = inlined_call_operand.hbm [shape: f32[2,16,16], index: 1, kind: input, shape index: {}]
  %s2 = inlined_call_operand.hbm [shape: f32[2,16,16], index: 2, kind: input, shape index: {}]
  %s3 = inlined_call_operand.hbm [shape: f32[2,1,128], index: 3, kind: output, shape index: {}]
  %s4 = sld [smem:[#allocation0]]
  $region65: #{tpu_custom_call.1} parent=0
    _
  %s6 = ssub.s32 1, %s4
  %s7 = scalar_select 0, %s6, %s4
  $region1: #{tpu_custom_call.1} parent=0
    #allocation2 [shape = 'u8[16384]{0}', space=vmem, size = 0x4000, scoped, tag = 'input window, operand 0']
    #allocation3 [shape = 's32[2]{0}', space=sflag, size = 0x8, scoped, tag = 'scoped memory for tpu_custom_call.1']
    #allocation4 [shape = 's32[2]{0}', space=sflag, size = 0x8, scoped, tag = 'scoped memory for tpu_custom_call.1']
    #allocation5 [shape = 'u8[16384]{0}', space=vmem, size = 0x4000, scoped, tag = 'input window, operand 1']
    #allocation6 [shape = 's32[2]{0}', space=sflag, size = 0x8, scoped, tag = 'scoped memory for tpu_custom_call.1']
    #allocation7 [shape = 'u8[16384]{0}', space=vmem, size = 0x4000, scoped, tag = 'input window, operand 2']
    #allocation8 [shape = 'u8[1024]{0}', space=vmem, size = 0x400, scoped, tag = 'output window, operand 0']
    %8 = vsyncpa [#allocation3], 0
    %s9 = scalar_lea.sflag [#allocation3], 1
    %10 = vsyncpa %s9, 0
    %11 = vsyncpa [#allocation6], 0
    %s12 = scalar_lea.sflag [#allocation6], 1
    %13 = vsyncpa %s12, 0
    %14 = vsyncpa [#allocation4], 0
    %s15 = scalar_lea.sflag [#allocation4], 1
    %16 = vsyncpa %s15, 0
    loop: start=0, step=1, limit=4
    $region2: #{tpu_custom_call.1} parent=1 // loop_pre_header
      _
    $region3: #{tpu_custom_call.1} parent=1 // loop_header
      %s18 = sphi 0, %s22
      %p19 = scmp.ge.s32.totalorder %s18, 4
      %s25 = sphi 0, %s37
      %s26 = sphi 0, %s33
      %s27 = sphi 0, %s25
      %s28 = sphi 0, %s26
      %s29 = sphi 0, %s27
      %s30 = sphi 0, %s28
      %s42 = sphi 0, %s44
      %s45 = sphi 0, %s42
      %s46 = sphi 0, %s45
      %s62 = sphi 0, %s46
      %s70 = sphi 0, %s72
      %s73 = sphi 0, %s70
      %s74 = sphi 0, %s73
      %s90 = sphi 0, %s74
      %s98 = sphi 0, %s100
      %s101 = sphi 0, %s98
      %s102 = sphi 0, %s101
      %s118 = sphi 0, %s102
      %s124 = sphi 0, %s126
      %s127 = sphi 0, %s124
      %s128 = sphi 0, %s127
      %s144 = sphi 0, %s128
    $region4: #{tpu_custom_call.1} parent=1 // loop_header_branch
      %21 = sbr.rel (%p19) target = $region8
    $region5: #{tpu_custom_call.1} parent=1 // loop_body
      %s23 = ssub.s32 %s18, 1
      %s24 = ssub.s32 %s18, 2
      %s31 = sadd.s32 1, %s26
      %p32 = scmp.ge.s32.totalorder %s31, 1
      %s33 = scalar_select %p32, 0, %s31
      %s34 = sadd.s32 1, %s25
      %s35 = scalar_select %p32, %s34, %s25
      %p36 = scmp.ge.s32.totalorder %s35, 2
      %s37 = scalar_select %p36, 0, %s35
      %s38 = ssub.s32 %s25, %s37
      %s39 = ssub.s32 %s26, %s33
      %s40 = sor.u32 %s38, %s39
      %p41 = scmp.eq.s32.totalorder %s40, 0
      %s43 = sadd.s32 %s42, 1
      %s44 = scalar_select %p41, %s42, %s43
      %p47 = pneg %p41
      %p48 = scmp.eq.s32.totalorder %s18, 1
      %p49 = por %p47, %p48
      %p50 = scmp.ne.s32.totalorder %s42, %s45
      %p51 = scmp.eq.s32.totalorder %s18, 0
      %p52 = por %p50, %p51
      %p53 = scmp.ne.s32.totalorder %s42, %s45
      %p54 = scmp.eq.s32.totalorder %s23, 1
      %p55 = por %p53, %p54
      %p56 = scmp.ne.s32.totalorder %s45, %s46
      %p57 = scmp.eq.s32.totalorder %s23, 0
      %p58 = por %p56, %p57
      %p59 = scmp.ne.s32.totalorder %s45, %s46
      %p60 = scmp.eq.s32.totalorder %s24, 1
      %p61 = por %p59, %p60
      %p63 = scmp.ne.s32.totalorder %s46, %s62
      %p64 = scmp.eq.s32.totalorder %s24, 0
      %p65 = por %p63, %p64
      %s66 = ssub.s32 %s25, %s37
      %s67 = ssub.s32 %s26, %s33
      %s68 = sor.u32 %s66, %s67
      %p69 = scmp.eq.s32.totalorder %s68, 0
      %s71 = sadd.s32 %s70, 1
      %s72 = scalar_select %p69, %s70, %s71
      %p75 = pneg %p69
      %p76 = scmp.eq.s32.totalorder %s18, 1
      %p77 = por %p75, %p76
      %p78 = scmp.ne.s32.totalorder %s70, %s73
      %p79 = scmp.eq.s32.totalorder %s18, 0
      %p80 = por %p78, %p79
      %p81 = scmp.ne.s32.totalorder %s70, %s73
      %p82 = scmp.eq.s32.totalorder %s23, 1
      %p83 = por %p81, %p82
      %p84 = scmp.ne.s32.totalorder %s73, %s74
      %p85 = scmp.eq.s32.totalorder %s23, 0
      %p86 = por %p84, %p85
      %p87 = scmp.ne.s32.totalorder %s73, %s74
      %p88 = scmp.eq.s32.totalorder %s24, 1
      %p89 = por %p87, %p88
      %p91 = scmp.ne.s32.totalorder %s74, %s90
      %p92 = scmp.eq.s32.totalorder %s24, 0
      %p93 = por %p91, %p92
      %s94 = ssub.s32 %s25, %s37
      %s95 = ssub.s32 %s26, %s33
      %s96 = sor.u32 %s94, %s95
      %p97 = scmp.eq.s32.totalorder %s96, 0
      %s99 = sadd.s32 %s98, 1
      %s100 = scalar_select %p97, %s98, %s99
      %p103 = pneg %p97
      %p104 = scmp.eq.s32.totalorder %s18, 1
      %p105 = por %p103, %p104
      %p106 = scmp.ne.s32.totalorder %s98, %s101
      %p107 = scmp.eq.s32.totalorder %s18, 0
      %p108 = por %p106, %p107
      %p109 = scmp.ne.s32.totalorder %s98, %s101
      %p110 = scmp.eq.s32.totalorder %s23, 1
      %p111 = por %p109, %p110
      %p112 = scmp.ne.s32.totalorder %s101, %s102
      %p113 = scmp.eq.s32.totalorder %s23, 0
      %p114 = por %p112, %p113
      %p115 = scmp.ne.s32.totalorder %s101, %s102
      %p116 = scmp.eq.s32.totalorder %s24, 1
      %p117 = por %p115, %p116
      %p119 = scmp.ne.s32.totalorder %s102, %s118
      %p120 = scmp.eq.s32.totalorder %s24, 0
      %p121 = por %p119, %p120
      %s122 = ssub.s32 %s25, %s37
      %p123 = scmp.eq.s32.totalorder %s122, 0
      %s125 = sadd.s32 %s124, 1
      %s126 = scalar_select %p123, %s124, %s125
      %p129 = pneg %p123
      %p130 = scmp.eq.s32.totalorder %s18, 1
      %p131 = por %p129, %p130
      %p132 = scmp.ne.s32.totalorder %s124, %s127
      %p133 = scmp.eq.s32.totalorder %s18, 0
      %p134 = por %p132, %p133
      %p135 = scmp.ne.s32.totalorder %s124, %s127
      %p136 = scmp.eq.s32.totalorder %s23, 1
      %p137 = por %p135, %p136
      %p138 = scmp.ne.s32.totalorder %s127, %s128
      %p139 = scmp.eq.s32.totalorder %s23, 0
      %p140 = por %p138, %p139
      %p141 = scmp.ne.s32.totalorder %s127, %s128
      %p142 = scmp.eq.s32.totalorder %s24, 1
      %p143 = por %p141, %p142
      %p145 = scmp.ne.s32.totalorder %s128, %s144
      %p146 = scmp.eq.s32.totalorder %s24, 0
      %p147 = por %p145, %p146
      %p148 = scmp.le.s32.totalorder 1, %s18
      %p149 = scmp.lt.s32.totalorder %s18, 3
      %p150 = pnand %p148, %p149
      %p151 = pneg %p150
      // Predicated region
      $region9: #{tpu_custom_call.1} parent=5 // pred_check
        _
      $region10: #{tpu_custom_call.1} parent=5 // pred_check_branch
        %153 = sbr.rel (%p150) target = $region12
      $region11: #{tpu_custom_call.1} parent=5 // pred_region
        %s154 = ssub.s32 %s18, 1
      $region12: #{tpu_custom_call.1} parent=5 // pred_fallthru
        _
      %p155 = scmp.lt.s32.totalorder %s18, 2
      // Predicated region
      $region13: #{tpu_custom_call.1} parent=5 // pred_check
        %p156 = pneg %p155
      $region14: #{tpu_custom_call.1} parent=5 // pred_check_branch
        %158 = sbr.rel (%p156) target = $region16
      $region15: #{tpu_custom_call.1} parent=5 // pred_region
        // Predicated region
        $region17: #{tpu_custom_call.1} parent=15 // pred_check
          %p159 = pneg %p52
        $region18: #{tpu_custom_call.1} parent=15 // pred_check_branch
          %161 = sbr.rel (%p159) target = $region20
        $region19: #{tpu_custom_call.1} parent=15 // pred_region
          %s162 = sand.u32 %s42, 1
          %s163 = scalar_lea.sflag [#allocation3], %s162
          %s164 = sand.u32 %s42, 1
          %s165 = smul.addr %s164, 16
          %s166 = scalar_lea.vmem [#allocation2], %s165
          %s167 = smul.u32 2, %s26
          %s169 = ssub.s32 256, 256
          %170 = vsyncadd %s163, %s169
          %s171 = smul.addr %s25, 2
          %s172 = sadd.s32 %s167, %s171
          %s173 = smul.addr %s172, 128
          %s174 = scalar_lea.hbm %s0, %s173
          %s175 = sshll.u32 %s166, 4
          %s176 = int_to_ptr.vmem [resolvable:$true] %s175
          %181 = dma.hbm_to_vmem [thread:$0]  %s174, 256, %s176, %s163, 128, 128, 8
        $region20: #{tpu_custom_call.1} parent=15 // pred_fallthru
          _
        // Predicated region
        $region21: #{tpu_custom_call.1} parent=15 // pred_check
          %p182 = pneg %p80
        $region22: #{tpu_custom_call.1} parent=15 // pred_check_branch
          %184 = sbr.rel (%p182) target = $region24
        $region23: #{tpu_custom_call.1} parent=15 // pred_region
          %s185 = sand.u32 %s18, 1
          %s186 = scalar_lea.sflag [#allocation6], %s185
          %s187 = sand.u32 %s70, 1
          %s188 = smul.addr %s187, 16
          %s189 = scalar_lea.vmem [#allocation5], %s188
          %s190 = smul.u32 2, %s26
          %s192 = ssub.s32 256, 256
          %193 = vsyncadd %s186, %s192
          %s194 = smul.addr %s25, 2
          %s195 = sadd.s32 %s190, %s194
          %s196 = smul.addr %s195, 128
          %s197 = scalar_lea.hbm %s1, %s196
          %s198 = sshll.u32 %s189, 4
          %s199 = int_to_ptr.vmem [resolvable:$true] %s198
          %204 = dma.hbm_to_vmem [thread:$0]  %s197, 256, %s199, %s186, 128, 128, 8
        $region24: #{tpu_custom_call.1} parent=15 // pred_fallthru
          _
        // Predicated region
        $region25: #{tpu_custom_call.1} parent=15 // pred_check
          %p205 = pneg %p108
        $region26: #{tpu_custom_call.1} parent=15 // pred_check_branch
          %207 = sbr.rel (%p205) target = $region28
        $region27: #{tpu_custom_call.1} parent=15 // pred_region
          %s208 = sand.u32 %s18, 1
          %s209 = scalar_lea.sflag [#allocation6], %s208
          %s210 = sand.u32 %s98, 1
          %s211 = smul.addr %s210, 16
          %s212 = scalar_lea.vmem [#allocation7], %s211
          %s213 = smul.u32 2, %s26
          %s215 = ssub.s32 256, 256
          %216 = vsyncadd %s209, %s215
          %s217 = smul.addr %s25, 2
          %s218 = sadd.s32 %s213, %s217
          %s219 = smul.addr %s218, 128
          %s220 = scalar_lea.hbm %s2, %s219
          %s221 = sshll.u32 %s212, 4
          %s222 = int_to_ptr.vmem [resolvable:$true] %s221
          %227 = dma.hbm_to_vmem [thread:$0]  %s220, 256, %s222, %s209, 128, 128, 8
        $region28: #{tpu_custom_call.1} parent=15 // pred_fallthru
          _
      $region16: #{tpu_custom_call.1} parent=5 // pred_fallthru
        _
      %p228 = scmp.le.s32.totalorder 1, %s18
      %p229 = scmp.lt.s32.totalorder %s18, 3
      %p230 = pnand %p228, %p229
      %p231 = pneg %p230
      // Predicated region
      $region29: #{tpu_custom_call.1} parent=5 // pred_check
        _
      $region30: #{tpu_custom_call.1} parent=5 // pred_check_branch
        %233 = sbr.rel (%p230) target = $region32
      $region31: #{tpu_custom_call.1} parent=5 // pred_region
        %s234 = ssub.s32 %s18, 1
        %s235 = sand.u32 %s45, 1
        %s236 = scalar_lea.sflag [#allocation3], %s235
        %s237 = sand.u32 %s45, 1
        %s238 = smul.addr %s237, 16
        %s239 = scalar_lea.vmem [#allocation2], %s238
        // Predicated region
        $region33: #{tpu_custom_call.1} parent=31 // pred_check
          %p240 = pneg %p58
        $region34: #{tpu_custom_call.1} parent=31 // pred_check_branch
          %242 = sbr.rel (%p240) target = $region36
        $region35: #{tpu_custom_call.1} parent=31 // pred_region
          %243 = dma.done %s236, 256
        $region36: #{tpu_custom_call.1} parent=31 // pred_fallthru
          _
        %s244 = sand.u32 %s23, 1
        %s245 = scalar_lea.sflag [#allocation6], %s244
        %s246 = sand.u32 %s73, 1
        %s247 = smul.addr %s246, 16
        %s248 = scalar_lea.vmem [#allocation5], %s247
        // Predicated region
        $region37: #{tpu_custom_call.1} parent=31 // pred_check
          %p249 = pneg %p86
        $region38: #{tpu_custom_call.1} parent=31 // pred_check_branch
          %251 = sbr.rel (%p249) target = $region40
        $region39: #{tpu_custom_call.1} parent=31 // pred_region
          %252 = dma.done %s245, 256
        $region40: #{tpu_custom_call.1} parent=31 // pred_fallthru
          _
        %s253 = sand.u32 %s23, 1
        %s254 = scalar_lea.sflag [#allocation6], %s253
        %s255 = sand.u32 %s101, 1
        %s256 = smul.addr %s255, 16
        %s257 = scalar_lea.vmem [#allocation7], %s256
        // Predicated region
        $region41: #{tpu_custom_call.1} parent=31 // pred_check
          %p258 = pneg %p114
        $region42: #{tpu_custom_call.1} parent=31 // pred_check_branch
          %260 = sbr.rel (%p258) target = $region44
        $region43: #{tpu_custom_call.1} parent=31 // pred_region
          %261 = dma.done %s254, 256
        $region44: #{tpu_custom_call.1} parent=31 // pred_fallthru
          _
        %s262 = sand.u32 %s45, 1
        %s263 = scalar_lea.sflag [#allocation3], %s262
        %s264 = sand.u32 %s45, 1
        %s265 = smul.addr %s264, 16
        %s266 = scalar_lea.vmem [#allocation2], %s265
        %p267 = pneg %p58
        %p268 = pneg %p55
        %s269 = sand.u32 %s23, 1
        %s270 = scalar_lea.sflag [#allocation6], %s269
        %s271 = sand.u32 %s73, 1
        %s272 = smul.addr %s271, 16
        %s273 = scalar_lea.vmem [#allocation5], %s272
        %p274 = pneg %p86
        %p275 = pneg %p83
        %s276 = sand.u32 %s23, 1
        %s277 = scalar_lea.sflag [#allocation6], %s276
        %s278 = sand.u32 %s101, 1
        %s279 = smul.addr %s278, 16
        %s280 = scalar_lea.vmem [#allocation7], %s279
        %p281 = pneg %p114
        %p282 = pneg %p111
        %p283 = pneg %p140
        %p284 = pneg %p137
        %s285 = sand.u32 %s127, 1
        %s286 = scalar_lea.sflag [#allocation4], %s285
        %s287 = sand.u32 %s127, 1
        %s288 = scalar_lea.vmem [#allocation8], %s287
        %s289 = smul.u32 2, %s28
        %s290 = smul.u32 2, %s28
        %s291 = smul.u32 2, %s28
        %v292 = vld [vmem:[%s257] sm:$0xff]
        %v293 = vld [vmem:[%s257 + $0x8] sm:$0xff]
        %vm294 = vcmp.gt.f32.partialorder %v292, 0.0
        %vm295 = vcmp.gt.f32.partialorder %v293, 0.0
        %v296 = vsel %vm294, 1, 0
        %v297 = vsel %vm295, 1, 0
        %v298 = vcvt.s32.f32 %v296
        %v299 = vcvt.s32.f32 %v297
        %v300 = vld [vmem:[%s239] sm:$0xff]
        %v301 = vld [vmem:[%s239 + $0x8] sm:$0xff]
        %v302 = vld [vmem:[%s248] sm:$0xff]
        %v303 = vld [vmem:[%s248 + $0x8] sm:$0xff]
        %v304 = vsel %vm294, %v300, 1.0
        %v305 = vsel %vm295, %v301, 1.0
        %v306 = vsel %vm294, %v302, 1.0
        %v307 = vsel %vm295, %v303, 1.0
        %v308 = vadd.f32 %v304, 1e-08
        %v309 = vadd.f32 %v305, 1e-08
        %v310 = vlog2.pop %v308
        %v311 = vmul.f32 %v310, 0.6931472
        %v312 = vlog2.pop %v309
        %v313 = vmul.f32 %v312, 0.6931472
        %v314 = vsel %vm294, %v311, 0.0
        %v315 = vsel %vm295, %v313, 0.0
        %v316 = vadd.f32 %v306, 1e-08
        %v317 = vadd.f32 %v307, 1e-08
        %v318 = vlog2.pop %v316
        %v319 = vmul.f32 %v318, 0.6931472
        %v320 = vlog2.pop %v317
        %v321 = vmul.f32 %v320, 0.6931472
        %v322 = vsel %vm294, %v319, 0.0
        %v323 = vsel %vm295, %v321, 0.0
        %vm324 = vcmask 130048
        %v325 = vsel %vm324, %v298, 0.0
        %v326 = vsel %vm324, %v299, 0.0
        %v327 = vadd.f32 %v325, %v326
        %328 = vadd.xlane.f32.xlu0 %v327
        %v329 = vpop.xlane.xlu0 %328
        %v330 = vrot.slane %v329, 4
        %v331 = vadd.f32 %v329, %v330
        %v332 = vrot.slane %v331, 2
        %v333 = vadd.f32 %v331, %v332
        %v334 = vrot.slane %v333, 1
        %v335 = vadd.f32 %v333, %v334
        %s336 = vtos %v335
        %v337 = vsel %vm324, %v314, 0.0
        %v338 = vsel %vm324, %v315, 0.0
        %v339 = vadd.f32 %v337, %v338
        %340 = vadd.xlane.f32.xlu0 %v339
        %v341 = vpop.xlane.xlu0 %340
        %v342 = vrot.slane %v341, 4
        %v343 = vadd.f32 %v341, %v342
        %v344 = vrot.slane %v343, 2
        %v345 = vadd.f32 %v343, %v344
        %v346 = vrot.slane %v345, 1
        %v347 = vadd.f32 %v345, %v346
        %s348 = vtos %v347
        %v349 = vsel %vm324, %v322, 0.0
        %v350 = vsel %vm324, %v323, 0.0
        %v351 = vadd.f32 %v349, %v350
        %352 = vadd.xlane.f32.xlu0 %v351
        %v353 = vpop.xlane.xlu0 %352
        %v354 = vrot.slane %v353, 4
        %v355 = vadd.f32 %v353, %v354
        %v356 = vrot.slane %v355, 2
        %v357 = vadd.f32 %v355, %v356
        %v358 = vrot.slane %v357, 1
        %v359 = vadd.f32 %v357, %v358
        %s360 = vtos %v359
        %v361 = vmul.f32 %v314, %v322
        %v362 = vmul.f32 %v315, %v323
        %v363 = vsel %vm324, %v361, 0.0
        %v364 = vsel %vm324, %v362, 0.0
        %v365 = vadd.f32 %v363, %v364
        %366 = vadd.xlane.f32.xlu0 %v365
        %v367 = vpop.xlane.xlu0 %366
        %v368 = vrot.slane %v367, 4
        %v369 = vadd.f32 %v367, %v368
        %v370 = vrot.slane %v369, 2
        %v371 = vadd.f32 %v369, %v370
        %v372 = vrot.slane %v371, 1
        %v373 = vadd.f32 %v371, %v372
        %s374 = vtos %v373
        %v375 = vmul.f32 %v314, %v314
        %v376 = vmul.f32 %v315, %v315
        %v377 = vsel %vm324, %v375, 0.0
        %v378 = vsel %vm324, %v376, 0.0
        %v379 = vadd.f32 %v377, %v378
        %380 = vadd.xlane.f32.xlu0 %v379
        %v381 = vpop.xlane.xlu0 %380
        %v382 = vrot.slane %v381, 4
        %v383 = vadd.f32 %v381, %v382
        %v384 = vrot.slane %v383, 2
        %v385 = vadd.f32 %v383, %v384
        %v386 = vrot.slane %v385, 1
        %v387 = vadd.f32 %v385, %v386
        %s388 = vtos %v387
        %v389 = vlaneseq
        %v390 = vand.u32 %v389, 127
        %vm391 = vcmp.eq.s32.totalorder %v390, 0
        %v392 = vstv %s336
        %v393 = vsel %vm391, %v392, 0.0
        %v394 = vadd.f32 %v393, 0.0
        %vm395 = vcmp.eq.s32.totalorder %v390, 1
        %v396 = vstv %s348
        %v397 = vsel %vm395, %v396, 0.0
        %v398 = vadd.f32 %v394, %v397
        %vm399 = vcmp.eq.s32.totalorder %v390, 2
        %v400 = vstv %s360
        %v401 = vsel %vm399, %v400, 0.0
        %v402 = vadd.f32 %v398, %v401
        %vm403 = vcmp.eq.s32.totalorder %v390, 3
        %v404 = vstv %s374
        %v405 = vsel %vm403, %v404, 0.0
        %v406 = vadd.f32 %v402, %v405
        %vm407 = vcmp.eq.s32.totalorder %v390, 4
        %v408 = vstv %s388
        %v409 = vsel %vm407, %v408, 0.0
        %v410 = vadd.f32 %v406, %v409
        %p411 = scmp.eq.s32.totalorder %s28, 0
        // Predicated region
        $region45: #{tpu_custom_call.1} parent=31 // pred_check
          %p412 = pneg %p411
        $region46: #{tpu_custom_call.1} parent=31 // pred_check_branch
          %414 = sbr.rel (%p412) target = $region48
        $region47: #{tpu_custom_call.1} parent=31 // pred_region
          %415 = vst [vmem:[%s288] sm:$0x1] %v410
        $region48: #{tpu_custom_call.1} parent=31 // pred_fallthru
          _
        %p416 = scmp.gt.s32.totalorder %s28, 0
        // Predicated region
        $region49: #{tpu_custom_call.1} parent=31 // pred_check
          %p417 = pneg %p416
        $region50: #{tpu_custom_call.1} parent=31 // pred_check_branch
          %419 = sbr.rel (%p417) target = $region52
        $region51: #{tpu_custom_call.1} parent=31 // pred_region
          %v420 = vld [vmem:[%s288] sm:$0x1]
          %v421 = vadd.f32 %v420, %v410
          %422 = vst [vmem:[%s288] sm:$0x1] %v421
        $region52: #{tpu_custom_call.1} parent=31 // pred_fallthru
          _
        %s423 = sand.u32 %s127, 1
        %s424 = scalar_lea.sflag [#allocation4], %s423
        %s425 = sand.u32 %s127, 1
        %s426 = scalar_lea.vmem [#allocation8], %s425
        // Predicated region
        $region53: #{tpu_custom_call.1} parent=31 // pred_check
          %p427 = pneg %p137
        $region54: #{tpu_custom_call.1} parent=31 // pred_check_branch
          %429 = sbr.rel (%p427) target = $region56
        $region55: #{tpu_custom_call.1} parent=31 // pred_region
          %s431 = ssub.s32 16, 16
          %432 = vsyncadd %s424, %s431
          %s433 = smul.addr %s27, 16
          %s434 = scalar_lea.hbm %s3, %s433
          %s436 = sshll.u32 %s426, 4
          %s437 = int_to_ptr.vmem [resolvable:$true] %s436
          %439 = dma.vmem_to_hbm [thread:$0]  %s437, 16, %s434, %s424
        $region56: #{tpu_custom_call.1} parent=31 // pred_fallthru
          _
      $region32: #{tpu_custom_call.1} parent=5 // pred_fallthru
        _
      %p440 = scmp.le.s32.totalorder 2, %s18
      // Predicated region
      $region57: #{tpu_custom_call.1} parent=5 // pred_check
        %p441 = pneg %p440
      $region58: #{tpu_custom_call.1} parent=5 // pred_check_branch
        %443 = sbr.rel (%p441) target = $region60
      $region59: #{tpu_custom_call.1} parent=5 // pred_region
        %s444 = ssub.s32 %s18, 2
        // Predicated region
        $region61: #{tpu_custom_call.1} parent=59 // pred_check
          %p445 = pneg %p143
        $region62: #{tpu_custom_call.1} parent=59 // pred_check_branch
          %447 = sbr.rel (%p445) target = $region64
        $region63: #{tpu_custom_call.1} parent=59 // pred_region
          %s448 = sand.u32 %s128, 1
          %s449 = scalar_lea.sflag [#allocation4], %s448
          %s450 = sand.u32 %s128, 1
          %s451 = scalar_lea.vmem [#allocation8], %s450
          %452 = dma.done %s449, 16
        $region64: #{tpu_custom_call.1} parent=59 // pred_fallthru
          _
      $region60: #{tpu_custom_call.1} parent=5 // pred_fallthru
        _
    $region6: #{tpu_custom_call.1} parent=1 // loop_footer
      %s22 = sadd.s32 1, %s18
    $region7: #{tpu_custom_call.1} parent=1 // loop_footer_branch
      %17 = sbr.rel target = $region3
    $region8: #{tpu_custom_call.1} parent=1 // loop_exit
      _
    %453 = vsyncpa [#allocation3], 1
    %s454 = scalar_lea.sflag [#allocation3], 1
    %455 = vsyncpa %s454, 1
    %456 = vsyncpa [#allocation6], 1
    %s457 = scalar_lea.sflag [#allocation6], 1
    %458 = vsyncpa %s457, 1
    %459 = vsyncpa [#allocation4], 1
    %s460 = scalar_lea.sflag [#allocation4], 1
    %461 = vsyncpa %s460, 1

</llo_original>
